<compile_context>
chip_gen: v5e
topology: v5e:2x2
jax: 0.10.0
libtpu: 0.0.40
codegen_flags: <defaults>
</compile_context>

<pallas_src>
import functools
import math

import jax
import jax.numpy as jnp
from jax.experimental import pallas as pl
from jax.experimental.pallas import tpu as pltpu


def combine_torch_lstm_bias(bias_ih, bias_hh):
    """PyTorch LSTM has two bias vectors; the kernel assumes their sum."""
    return bias_ih + bias_hh


# ----------------------------------------------------------------------------
# Fused kernel: hoisted (time-major) input projection + unrolled LSTM
# recurrence + dueling head, all in one invocation, fully VMEM-resident.
# ----------------------------------------------------------------------------
def dqn_fused_kernel(obs_ref, h0_ref, c0_ref, wih_ref, whh_ref, b_ref,
                     w_head_ref, b_head_ref,
                     out_ref, hT_ref, cT_ref, q_ref):
    B, H = h0_ref.shape
    TB = obs_ref.shape[0]
    T = TB // B
    A = q_ref.shape[-1]

    # ---- hoisted input projection, time-major: one MXU pass for all steps --
    x_all = obs_ref[...].astype(jnp.float32)                          # (T*B, F)
    gates_x = (jnp.dot(x_all, wih_ref[...],
                       preferred_element_type=jnp.float32)
               + b_ref[...])                                          # (T*B, 4H)

    whh = whh_ref[...]
    h = h0_ref[...].astype(jnp.float32)                               # (B, H)
    c = c0_ref[...].astype(jnp.float32)                               # (B, H)

    # ---- serial recurrence, statically unrolled (T small & static) ---------
    # PyTorch gate order: i, f, g, o.
    hs = []
    for t in range(T):
        gates = gates_x[t * B:(t + 1) * B, :] + jnp.dot(
            h, whh, preferred_element_type=jnp.float32)               # (B, 4H)
        # Two full-vreg EUP passes instead of four lane-masked ones.
        sig = jax.nn.sigmoid(gates)
        tnh = jnp.tanh(gates)
        i_g = sig[:, 0 * H:1 * H]
        f_g = sig[:, 1 * H:2 * H]
        g_g = tnh[:, 2 * H:3 * H]
        o_g = sig[:, 3 * H:4 * H]
        c = f_g * c + i_g * g_g
        h = o_g * jnp.tanh(c)
        hs.append(h)

    # ---- single lane-dense store of the whole output sequence --------------
    out_ref[...] = jnp.concatenate(hs, axis=-1).astype(out_ref.dtype)  # (B, T*H)
    hT_ref[...] = h.astype(hT_ref.dtype)
    cT_ref[...] = c.astype(cT_ref.dtype)

    # ---- fused dueling head; mean(adv) folded into the matmul --------------
    # head columns = [ adv (A) | val (1) | mean(adv) (1) ]
    head = (jnp.dot(h, w_head_ref[...],
                    preferred_element_type=jnp.float32)
            + b_head_ref[...])                                        # (B, A+2)
    adv = head[:, :A]
    val = head[:, A:A + 1]
    mean_adv = head[:, A + 1:A + 2]
    q_ref[...] = (val + adv - mean_adv).astype(q_ref.dtype)


# ----------------------------------------------------------------------------
# DQNNet forward (glue): obs is batch-first (B, T, F) like PyTorch.
# Returns (lstm_out (B,T,H), (hidden_state, cell_state), qout (B,)+action_shape)
# ----------------------------------------------------------------------------
def dqn_forward(obs_btf, hidden_state, cell_state, params, action_shape):
    B, T, F = obs_btf.shape
    H = hidden_state.shape[-1]
    A = int(math.prod(action_shape))

    # Time-major flatten: per-step gate slices inside the kernel become
    # contiguous sublane-row blocks (tiny one-off transpose in the wrapper).
    obs_tbf = jnp.transpose(obs_btf, (1, 0, 2)).reshape(T * B, F)

    # Single head matmul with the mean folded in: [w_adv | w_val | w_adv@1/A].
    ones_over_a = jnp.full((A, 1), 1.0 / A, params["w_adv"].dtype)
    w_head = jnp.concatenate(
        [params["w_adv"], params["w_val"], params["w_adv"] @ ones_over_a],
        axis=-1)                                                      # (H, A+2)
    b_head = jnp.concatenate(
        [params["b_adv"], params["b_val"],
         jnp.mean(params["b_adv"], axis=-1, keepdims=True)],
        axis=-1)                                                      # (1, A+2)

    vmem = pl.BlockSpec(memory_space=pltpu.MemorySpace.VMEM)

    out_flat, hT, cT, q = pl.pallas_call(
        dqn_fused_kernel,
        out_shape=(
            jax.ShapeDtypeStruct((B, T * H), jnp.float32),  # lstm_out (lane-dense)
            jax.ShapeDtypeStruct((B, H), jnp.float32),      # final hidden
            jax.ShapeDtypeStruct((B, H), jnp.float32),      # final cell
            jax.ShapeDtypeStruct((B, A), jnp.float32),      # q values
        ),
        in_specs=[vmem] * 8,
        out_specs=(vmem, vmem, vmem, vmem),
    )(obs_tbf, hidden_state, cell_state,
      params["wih"], params["whh"], params["b_lstm"], w_head, b_head)

    lstm_out = out_flat.reshape(B, T, H)        # free contiguous reshape
    qout = q.reshape((B,) + tuple(action_shape))
    return lstm_out, (hT, cT), qout


# ----------------------------------------------------------------------------
# Pure-JAX reference for correctness check.
# ----------------------------------------------------------------------------
def dqn_forward_ref(obs_btf, h0, c0, params, action_shape):
    B, T, F = obs_btf.shape
    H = h0.shape[-1]
    h, c = h0, c0
    outs = []
    for t in range(T):
        x = obs_btf[:, t, :]
        gates = x @ params["wih"] + h @ params["whh"] + params["b_lstm"]
        i_g = jax.nn.sigmoid(gates[:, 0 * H:1 * H])
        f_g = jax.nn.sigmoid(gates[:, 1 * H:2 * H])
        g_g = jnp.tanh(gates[:, 2 * H:3 * H])
        o_g = jax.nn.sigmoid(gates[:, 3 * H:4 * H])
        c = f_g * c + i_g * g_g
        h = o_g * jnp.tanh(c)
        outs.append(h)
    lstm_out = jnp.stack(outs, axis=1)
    last = lstm_out[:, -1, :]
    adv = last @ params["w_adv"] + params["b_adv"]
    val = last @ params["w_val"] + params["b_val"]
    q = val + (adv - adv.mean(axis=-1, keepdims=True))
    return lstm_out, (h, c), q.reshape((B,) + tuple(action_shape))


if __name__ == "__main__":
    # Small shapes consistent with the module.
    B, T, F, H = 2, 8, 32, 32      # batch, seq, feature (cnn_out proxy), lstm_hidden
    action_shape = (4,)
    A = 4

    key = jax.random.PRNGKey(0)
    ks = jax.random.split(key, 10)

    params = {
        "wih":    0.1 * jax.random.normal(ks[0], (F, 4 * H), jnp.float32),
        "whh":    0.1 * jax.random.normal(ks[1], (H, 4 * H), jnp.float32),
        # For real PyTorch weights: b_lstm = combine_torch_lstm_bias(b_ih, b_hh).
        "b_lstm": 0.1 * jax.random.normal(ks[2], (1, 4 * H), jnp.float32),
        "w_adv":  0.1 * jax.random.normal(ks[3], (H, A), jnp.float32),
        "b_adv":  0.1 * jax.random.normal(ks[4], (1, A), jnp.float32),
        "w_val":  0.1 * jax.random.normal(ks[5], (H, 1), jnp.float32),
        "b_val":  0.1 * jax.random.normal(ks[6], (1, 1), jnp.float32),
    }

    obs = jax.random.normal(ks[7], (B, T, F), jnp.float32)
    h0 = jax.random.normal(ks[8], (B, H), jnp.float32)
    c0 = jax.random.normal(ks[9], (B, H), jnp.float32)

    fwd = jax.jit(functools.partial(dqn_forward, action_shape=action_shape))
    lstm_out, (hT, cT), qout = fwd(obs, h0, c0, params)
    jax.block_until_ready((lstm_out, hT, cT, qout))

    # Correctness check against pure-JAX reference (tightened tolerance).
    ref_out, (ref_h, ref_c), ref_q = dqn_forward_ref(obs, h0, c0, params,
                                                     action_shape)
    assert jnp.allclose(lstm_out, ref_out, atol=1e-4, rtol=1e-4)
    assert jnp.allclose(hT, ref_h, atol=1e-4, rtol=1e-4)
    assert jnp.allclose(cT, ref_c, atol=1e-4, rtol=1e-4)
    assert jnp.allclose(qout, ref_q, atol=1e-4, rtol=1e-4)

    print("KERNEL_OK")
</pallas_src>

<mosaic_0001>
module attributes {stable_mosaic.version = 11 : i64} {
  func.func @dqn_fused_kernel(%arg0: memref<16x32xf32, #tpu.memory_space<vmem>>, %arg1: memref<2x32xf32, #tpu.memory_space<vmem>>, %arg2: memref<2x32xf32, #tpu.memory_space<vmem>>, %arg3: memref<32x128xf32, #tpu.memory_space<vmem>>, %arg4: memref<32x128xf32, #tpu.memory_space<vmem>>, %arg5: memref<1x128xf32, #tpu.memory_space<vmem>>, %arg6: memref<32x6xf32, #tpu.memory_space<vmem>>, %arg7: memref<1x6xf32, #tpu.memory_space<vmem>>, %arg8: memref<2x256xf32, #tpu.memory_space<vmem>>, %arg9: memref<2x32xf32, #tpu.memory_space<vmem>>, %arg10: memref<2x32xf32, #tpu.memory_space<vmem>>, %arg11: memref<2x4xf32, #tpu.memory_space<vmem>>) attributes {dimension_semantics = [], scalar_prefetch = 0 : i64, scratch_operands = 0 : i64, tpu.core_type = #tpu.core_type<tc>} {
    %c0 = arith.constant 0 : index
    %c0_0 = arith.constant 0 : index
    %0 = vector.load %arg0[%c0, %c0_0] : memref<16x32xf32, #tpu.memory_space<vmem>>, vector<16x32xf32>
    %c0_1 = arith.constant 0 : index
    %c0_2 = arith.constant 0 : index
    %1 = vector.load %arg3[%c0_1, %c0_2] : memref<32x128xf32, #tpu.memory_space<vmem>>, vector<32x128xf32>
    %cst = arith.constant dense<0.000000e+00> : vector<16x128xf32>
    %2 = tpu.matmul %0, %1, %cst {dimension_numbers = #tpu.dot_dimension_numbers<[1], [0], [0], [1], [0, 0, 1, 1], [], []>} : vector<16x32xf32>, vector<32x128xf32>, vector<16x128xf32> -> vector<16x128xf32>
    %c0_3 = arith.constant 0 : index
    %c0_4 = arith.constant 0 : index
    %3 = vector.load %arg5[%c0_3, %c0_4] : memref<1x128xf32, #tpu.memory_space<vmem>>, vector<1x128xf32>
    %4 = vector.broadcast %3 : vector<1x128xf32> to vector<16x128xf32>
    %5 = arith.addf %2, %4 : vector<16x128xf32>
    %c0_5 = arith.constant 0 : index
    %c0_6 = arith.constant 0 : index
    %6 = vector.load %arg4[%c0_5, %c0_6] : memref<32x128xf32, #tpu.memory_space<vmem>>, vector<32x128xf32>
    %c0_7 = arith.constant 0 : index
    %c0_8 = arith.constant 0 : index
    %7 = vector.load %arg1[%c0_7, %c0_8] : memref<2x32xf32, #tpu.memory_space<vmem>>, vector<2x32xf32>
    %c0_9 = arith.constant 0 : index
    %c0_10 = arith.constant 0 : index
    %8 = vector.load %arg2[%c0_9, %c0_10] : memref<2x32xf32, #tpu.memory_space<vmem>>, vector<2x32xf32>
    %9 = vector.extract_strided_slice %5 {offsets = [0, 0], sizes = [2, 128], strides = [1, 1]} : vector<16x128xf32> to vector<2x128xf32>
    %cst_11 = arith.constant dense<0.000000e+00> : vector<2x128xf32>
    %10 = tpu.matmul %7, %6, %cst_11 {dimension_numbers = #tpu.dot_dimension_numbers<[1], [0], [0], [1], [0, 0, 1, 1], [], []>} : vector<2x32xf32>, vector<32x128xf32>, vector<2x128xf32> -> vector<2x128xf32>
    %11 = arith.addf %9, %10 : vector<2x128xf32>
    %12 = arith.negf %11 : vector<2x128xf32>
    %13 = math.exp %12 : vector<2x128xf32>
    %cst_12 = arith.constant 1.000000e+00 : f32
    %14 = vector.broadcast %cst_12 : f32 to vector<2x128xf32>
    %15 = arith.addf %14, %13 : vector<2x128xf32>
    %16 = arith.divf %14, %15 : vector<2x128xf32>
    %17 = math.tanh %11 : vector<2x128xf32>
    %18 = vector.extract_strided_slice %16 {offsets = [0, 0], sizes = [2, 32], strides = [1, 1]} : vector<2x128xf32> to vector<2x32xf32>
    %19 = vector.extract_strided_slice %16 {offsets = [0, 32], sizes = [2, 32], strides = [1, 1]} : vector<2x128xf32> to vector<2x32xf32>
    %20 = vector.extract_strided_slice %17 {offsets = [0, 64], sizes = [2, 32], strides = [1, 1]} : vector<2x128xf32> to vector<2x32xf32>
    %21 = vector.extract_strided_slice %16 {offsets = [0, 96], sizes = [2, 32], strides = [1, 1]} : vector<2x128xf32> to vector<2x32xf32>
    %22 = arith.mulf %19, %8 : vector<2x32xf32>
    %23 = arith.mulf %18, %20 : vector<2x32xf32>
    %24 = arith.addf %22, %23 : vector<2x32xf32>
    %25 = math.tanh %24 : vector<2x32xf32>
    %26 = arith.mulf %21, %25 : vector<2x32xf32>
    %27 = vector.extract_strided_slice %5 {offsets = [2, 0], sizes = [2, 128], strides = [1, 1]} : vector<16x128xf32> to vector<2x128xf32>
    %cst_13 = arith.constant dense<0.000000e+00> : vector<2x128xf32>
    %28 = tpu.matmul %26, %6, %cst_13 {dimension_numbers = #tpu.dot_dimension_numbers<[1], [0], [0], [1], [0, 0, 1, 1], [], []>} : vector<2x32xf32>, vector<32x128xf32>, vector<2x128xf32> -> vector<2x128xf32>
    %29 = arith.addf %27, %28 : vector<2x128xf32>
    %30 = arith.negf %29 : vector<2x128xf32>
    %31 = math.exp %30 : vector<2x128xf32>
    %cst_14 = arith.constant 1.000000e+00 : f32
    %32 = vector.broadcast %cst_14 : f32 to vector<2x128xf32>
    %33 = arith.addf %32, %31 : vector<2x128xf32>
    %34 = arith.divf %32, %33 : vector<2x128xf32>
    %35 = math.tanh %29 : vector<2x128xf32>
    %36 = vector.extract_strided_slice %34 {offsets = [0, 0], sizes = [2, 32], strides = [1, 1]} : vector<2x128xf32> to vector<2x32xf32>
    %37 = vector.extract_strided_slice %34 {offsets = [0, 32], sizes = [2, 32], strides = [1, 1]} : vector<2x128xf32> to vector<2x32xf32>
    %38 = vector.extract_strided_slice %35 {offsets = [0, 64], sizes = [2, 32], strides = [1, 1]} : vector<2x128xf32> to vector<2x32xf32>
    %39 = vector.extract_strided_slice %34 {offsets = [0, 96], sizes = [2, 32], strides = [1, 1]} : vector<2x128xf32> to vector<2x32xf32>
    %40 = arith.mulf %37, %24 : vector<2x32xf32>
    %41 = arith.mulf %36, %38 : vector<2x32xf32>
    %42 = arith.addf %40, %41 : vector<2x32xf32>
    %43 = math.tanh %42 : vector<2x32xf32>
    %44 = arith.mulf %39, %43 : vector<2x32xf32>
    %45 = vector.extract_strided_slice %5 {offsets = [4, 0], sizes = [2, 128], strides = [1, 1]} : vector<16x128xf32> to vector<2x128xf32>
    %cst_15 = arith.constant dense<0.000000e+00> : vector<2x128xf32>
    %46 = tpu.matmul %44, %6, %cst_15 {dimension_numbers = #tpu.dot_dimension_numbers<[1], [0], [0], [1], [0, 0, 1, 1], [], []>} : vector<2x32xf32>, vector<32x128xf32>, vector<2x128xf32> -> vector<2x128xf32>
    %47 = arith.addf %45, %46 : vector<2x128xf32>
    %48 = arith.negf %47 : vector<2x128xf32>
    %49 = math.exp %48 : vector<2x128xf32>
    %cst_16 = arith.constant 1.000000e+00 : f32
    %50 = vector.broadcast %cst_16 : f32 to vector<2x128xf32>
    %51 = arith.addf %50, %49 : vector<2x128xf32>
    %52 = arith.divf %50, %51 : vector<2x128xf32>
    %53 = math.tanh %47 : vector<2x128xf32>
    %54 = vector.extract_strided_slice %52 {offsets = [0, 0], sizes = [2, 32], strides = [1, 1]} : vector<2x128xf32> to vector<2x32xf32>
    %55 = vector.extract_strided_slice %52 {offsets = [0, 32], sizes = [2, 32], strides = [1, 1]} : vector<2x128xf32> to vector<2x32xf32>
    %56 = vector.extract_strided_slice %53 {offsets = [0, 64], sizes = [2, 32], strides = [1, 1]} : vector<2x128xf32> to vector<2x32xf32>
    %57 = vector.extract_strided_slice %52 {offsets = [0, 96], sizes = [2, 32], strides = [1, 1]} : vector<2x128xf32> to vector<2x32xf32>
    %58 = arith.mulf %55, %42 : vector<2x32xf32>
    %59 = arith.mulf %54, %56 : vector<2x32xf32>
    %60 = arith.addf %58, %59 : vector<2x32xf32>
    %61 = math.tanh %60 : vector<2x32xf32>
    %62 = arith.mulf %57, %61 : vector<2x32xf32>
    %63 = vector.extract_strided_slice %5 {offsets = [6, 0], sizes = [2, 128], strides = [1, 1]} : vector<16x128xf32> to vector<2x128xf32>
    %cst_17 = arith.constant dense<0.000000e+00> : vector<2x128xf32>
    %64 = tpu.matmul %62, %6, %cst_17 {dimension_numbers = #tpu.dot_dimension_numbers<[1], [0], [0], [1], [0, 0, 1, 1], [], []>} : vector<2x32xf32>, vector<32x128xf32>, vector<2x128xf32> -> vector<2x128xf32>
    %65 = arith.addf %63, %64 : vector<2x128xf32>
    %66 = arith.negf %65 : vector<2x128xf32>
    %67 = math.exp %66 : vector<2x128xf32>
    %cst_18 = arith.constant 1.000000e+00 : f32
    %68 = vector.broadcast %cst_18 : f32 to vector<2x128xf32>
    %69 = arith.addf %68, %67 : vector<2x128xf32>
    %70 = arith.divf %68, %69 : vector<2x128xf32>
    %71 = math.tanh %65 : vector<2x128xf32>
    %72 = vector.extract_strided_slice %70 {offsets = [0, 0], sizes = [2, 32], strides = [1, 1]} : vector<2x128xf32> to vector<2x32xf32>
    %73 = vector.extract_strided_slice %70 {offsets = [0, 32], sizes = [2, 32], strides = [1, 1]} : vector<2x128xf32> to vector<2x32xf32>
    %74 = vector.extract_strided_slice %71 {offsets = [0, 64], sizes = [2, 32], strides = [1, 1]} : vector<2x128xf32> to vector<2x32xf32>
    %75 = vector.extract_strided_slice %70 {offsets = [0, 96], sizes = [2, 32], strides = [1, 1]} : vector<2x128xf32> to vector<2x32xf32>
    %76 = arith.mulf %73, %60 : vector<2x32xf32>
    %77 = arith.mulf %72, %74 : vector<2x32xf32>
    %78 = arith.addf %76, %77 : vector<2x32xf32>
    %79 = math.tanh %78 : vector<2x32xf32>
    %80 = arith.mulf %75, %79 : vector<2x32xf32>
    %81 = vector.extract_strided_slice %5 {offsets = [8, 0], sizes = [2, 128], strides = [1, 1]} : vector<16x128xf32> to vector<2x128xf32>
    %cst_19 = arith.constant dense<0.000000e+00> : vector<2x128xf32>
    %82 = tpu.matmul %80, %6, %cst_19 {dimension_numbers = #tpu.dot_dimension_numbers<[1], [0], [0], [1], [0, 0, 1, 1], [], []>} : vector<2x32xf32>, vector<32x128xf32>, vector<2x128xf32> -> vector<2x128xf32>
    %83 = arith.addf %81, %82 : vector<2x128xf32>
    %84 = arith.negf %83 : vector<2x128xf32>
    %85 = math.exp %84 : vector<2x128xf32>
    %cst_20 = arith.constant 1.000000e+00 : f32
    %86 = vector.broadcast %cst_20 : f32 to vector<2x128xf32>
    %87 = arith.addf %86, %85 : vector<2x128xf32>
    %88 = arith.divf %86, %87 : vector<2x128xf32>
    %89 = math.tanh %83 : vector<2x128xf32>
    %90 = vector.extract_strided_slice %88 {offsets = [0, 0], sizes = [2, 32], strides = [1, 1]} : vector<2x128xf32> to vector<2x32xf32>
    %91 = vector.extract_strided_slice %88 {offsets = [0, 32], sizes = [2, 32], strides = [1, 1]} : vector<2x128xf32> to vector<2x32xf32>
    %92 = vector.extract_strided_slice %89 {offsets = [0, 64], sizes = [2, 32], strides = [1, 1]} : vector<2x128xf32> to vector<2x32xf32>
    %93 = vector.extract_strided_slice %88 {offsets = [0, 96], sizes = [2, 32], strides = [1, 1]} : vector<2x128xf32> to vector<2x32xf32>
    %94 = arith.mulf %91, %78 : vector<2x32xf32>
    %95 = arith.mulf %90, %92 : vector<2x32xf32>
    %96 = arith.addf %94, %95 : vector<2x32xf32>
    %97 = math.tanh %96 : vector<2x32xf32>
    %98 = arith.mulf %93, %97 : vector<2x32xf32>
    %99 = vector.extract_strided_slice %5 {offsets = [10, 0], sizes = [2, 128], strides = [1, 1]} : vector<16x128xf32> to vector<2x128xf32>
    %cst_21 = arith.constant dense<0.000000e+00> : vector<2x128xf32>
    %100 = tpu.matmul %98, %6, %cst_21 {dimension_numbers = #tpu.dot_dimension_numbers<[1], [0], [0], [1], [0, 0, 1, 1], [], []>} : vector<2x32xf32>, vector<32x128xf32>, vector<2x128xf32> -> vector<2x128xf32>
    %101 = arith.addf %99, %100 : vector<2x128xf32>
    %102 = arith.negf %101 : vector<2x128xf32>
    %103 = math.exp %102 : vector<2x128xf32>
    %cst_22 = arith.constant 1.000000e+00 : f32
    %104 = vector.broadcast %cst_22 : f32 to vector<2x128xf32>
    %105 = arith.addf %104, %103 : vector<2x128xf32>
    %106 = arith.divf %104, %105 : vector<2x128xf32>
    %107 = math.tanh %101 : vector<2x128xf32>
    %108 = vector.extract_strided_slice %106 {offsets = [0, 0], sizes = [2, 32], strides = [1, 1]} : vector<2x128xf32> to vector<2x32xf32>
    %109 = vector.extract_strided_slice %106 {offsets = [0, 32], sizes = [2, 32], strides = [1, 1]} : vector<2x128xf32> to vector<2x32xf32>
    %110 = vector.extract_strided_slice %107 {offsets = [0, 64], sizes = [2, 32], strides = [1, 1]} : vector<2x128xf32> to vector<2x32xf32>
    %111 = vector.extract_strided_slice %106 {offsets = [0, 96], sizes = [2, 32], strides = [1, 1]} : vector<2x128xf32> to vector<2x32xf32>
    %112 = arith.mulf %109, %96 : vector<2x32xf32>
    %113 = arith.mulf %108, %110 : vector<2x32xf32>
    %114 = arith.addf %112, %113 : vector<2x32xf32>
    %115 = math.tanh %114 : vector<2x32xf32>
    %116 = arith.mulf %111, %115 : vector<2x32xf32>
    %117 = vector.extract_strided_slice %5 {offsets = [12, 0], sizes = [2, 128], strides = [1, 1]} : vector<16x128xf32> to vector<2x128xf32>
    %cst_23 = arith.constant dense<0.000000e+00> : vector<2x128xf32>
    %118 = tpu.matmul %116, %6, %cst_23 {dimension_numbers = #tpu.dot_dimension_numbers<[1], [0], [0], [1], [0, 0, 1, 1], [], []>} : vector<2x32xf32>, vector<32x128xf32>, vector<2x128xf32> -> vector<2x128xf32>
    %119 = arith.addf %117, %118 : vector<2x128xf32>
    %120 = arith.negf %119 : vector<2x128xf32>
    %121 = math.exp %120 : vector<2x128xf32>
    %cst_24 = arith.constant 1.000000e+00 : f32
    %122 = vector.broadcast %cst_24 : f32 to vector<2x128xf32>
    %123 = arith.addf %122, %121 : vector<2x128xf32>
    %124 = arith.divf %122, %123 : vector<2x128xf32>
    %125 = math.tanh %119 : vector<2x128xf32>
    %126 = vector.extract_strided_slice %124 {offsets = [0, 0], sizes = [2, 32], strides = [1, 1]} : vector<2x128xf32> to vector<2x32xf32>
    %127 = vector.extract_strided_slice %124 {offsets = [0, 32], sizes = [2, 32], strides = [1, 1]} : vector<2x128xf32> to vector<2x32xf32>
    %128 = vector.extract_strided_slice %125 {offsets = [0, 64], sizes = [2, 32], strides = [1, 1]} : vector<2x128xf32> to vector<2x32xf32>
    %129 = vector.extract_strided_slice %124 {offsets = [0, 96], sizes = [2, 32], strides = [1, 1]} : vector<2x128xf32> to vector<2x32xf32>
    %130 = arith.mulf %127, %114 : vector<2x32xf32>
    %131 = arith.mulf %126, %128 : vector<2x32xf32>
    %132 = arith.addf %130, %131 : vector<2x32xf32>
    %133 = math.tanh %132 : vector<2x32xf32>
    %134 = arith.mulf %129, %133 : vector<2x32xf32>
    %135 = vector.extract_strided_slice %5 {offsets = [14, 0], sizes = [2, 128], strides = [1, 1]} : vector<16x128xf32> to vector<2x128xf32>
    %cst_25 = arith.constant dense<0.000000e+00> : vector<2x128xf32>
    %136 = tpu.matmul %134, %6, %cst_25 {dimension_numbers = #tpu.dot_dimension_numbers<[1], [0], [0], [1], [0, 0, 1, 1], [], []>} : vector<2x32xf32>, vector<32x128xf32>, vector<2x128xf32> -> vector<2x128xf32>
    %137 = arith.addf %135, %136 : vector<2x128xf32>
    %138 = arith.negf %137 : vector<2x128xf32>
    %139 = math.exp %138 : vector<2x128xf32>
    %cst_26 = arith.constant 1.000000e+00 : f32
    %140 = vector.broadcast %cst_26 : f32 to vector<2x128xf32>
    %141 = arith.addf %140, %139 : vector<2x128xf32>
    %142 = arith.divf %140, %141 : vector<2x128xf32>
    %143 = math.tanh %137 : vector<2x128xf32>
    %144 = vector.extract_strided_slice %142 {offsets = [0, 0], sizes = [2, 32], strides = [1, 1]} : vector<2x128xf32> to vector<2x32xf32>
    %145 = vector.extract_strided_slice %142 {offsets = [0, 32], sizes = [2, 32], strides = [1, 1]} : vector<2x128xf32> to vector<2x32xf32>
    %146 = vector.extract_strided_slice %143 {offsets = [0, 64], sizes = [2, 32], strides = [1, 1]} : vector<2x128xf32> to vector<2x32xf32>
    %147 = vector.extract_strided_slice %142 {offsets = [0, 96], sizes = [2, 32], strides = [1, 1]} : vector<2x128xf32> to vector<2x32xf32>
    %148 = arith.mulf %145, %132 : vector<2x32xf32>
    %149 = arith.mulf %144, %146 : vector<2x32xf32>
    %150 = arith.addf %148, %149 : vector<2x32xf32>
    %151 = math.tanh %150 : vector<2x32xf32>
    %152 = arith.mulf %147, %151 : vector<2x32xf32>
    %153 = tpu.concatenate %26, %44, %62, %80, %98, %116, %134, %152 in 1 : vector<2x32xf32>, vector<2x32xf32>, vector<2x32xf32>, vector<2x32xf32>, vector<2x32xf32>, vector<2x32xf32>, vector<2x32xf32>, vector<2x32xf32> -> vector<2x256xf32>
    %c0_27 = arith.constant 0 : index
    %c0_28 = arith.constant 0 : index
    %154 = vector.load %arg8[%c0_27, %c0_28] : memref<2x256xf32, #tpu.memory_space<vmem>>, vector<2x256xf32>
    tpu.vector_store %arg8[%c0_27, %c0_28], %153 {strides = array<i32>} : memref<2x256xf32, #tpu.memory_space<vmem>>, vector<2x256xf32>,
    %c0_29 = arith.constant 0 : index
    %c0_30 = arith.constant 0 : index
    %155 = vector.load %arg9[%c0_29, %c0_30] : memref<2x32xf32, #tpu.memory_space<vmem>>, vector<2x32xf32>
    tpu.vector_store %arg9[%c0_29, %c0_30], %152 {strides = array<i32>} : memref<2x32xf32, #tpu.memory_space<vmem>>, vector<2x32xf32>,
    %c0_31 = arith.constant 0 : index
    %c0_32 = arith.constant 0 : index
    %156 = vector.load %arg10[%c0_31, %c0_32] : memref<2x32xf32, #tpu.memory_space<vmem>>, vector<2x32xf32>
    tpu.vector_store %arg10[%c0_31, %c0_32], %150 {strides = array<i32>} : memref<2x32xf32, #tpu.memory_space<vmem>>, vector<2x32xf32>,
    %c0_33 = arith.constant 0 : index
    %c0_34 = arith.constant 0 : index
    %157 = vector.load %arg6[%c0_33, %c0_34] : memref<32x6xf32, #tpu.memory_space<vmem>>, vector<32x6xf32>
    %cst_35 = arith.constant dense<0.000000e+00> : vector<2x6xf32>
    %158 = tpu.matmul %152, %157, %cst_35 {dimension_numbers = #tpu.dot_dimension_numbers<[1], [0], [0], [1], [0, 0, 1, 1], [], []>} : vector<2x32xf32>, vector<32x6xf32>, vector<2x6xf32> -> vector<2x6xf32>
    %c0_36 = arith.constant 0 : index
    %c0_37 = arith.constant 0 : index
    %159 = vector.load %arg7[%c0_36, %c0_37] : memref<1x6xf32, #tpu.memory_space<vmem>>, vector<1x6xf32>
    %160 = vector.broadcast %159 : vector<1x6xf32> to vector<2x6xf32>
    %161 = arith.addf %158, %160 : vector<2x6xf32>
    %162 = vector.extract_strided_slice %161 {offsets = [0, 0], sizes = [2, 4], strides = [1, 1]} : vector<2x6xf32> to vector<2x4xf32>
    %163 = vector.extract_strided_slice %161 {offsets = [0, 4], sizes = [2, 1], strides = [1, 1]} : vector<2x6xf32> to vector<2x1xf32>
    %164 = vector.extract_strided_slice %161 {offsets = [0, 5], sizes = [2, 1], strides = [1, 1]} : vector<2x6xf32> to vector<2x1xf32>
    %165 = vector.broadcast %163 : vector<2x1xf32> to vector<2x4xf32>
    %166 = arith.addf %165, %162 : vector<2x4xf32>
    %167 = vector.broadcast %164 : vector<2x1xf32> to vector<2x4xf32>
    %168 = arith.subf %166, %167 : vector<2x4xf32>
    %c0_38 = arith.constant 0 : index
    %c0_39 = arith.constant 0 : index
    %169 = vector.load %arg11[%c0_38, %c0_39] : memref<2x4xf32, #tpu.memory_space<vmem>>, vector<2x4xf32>
    tpu.vector_store %arg11[%c0_38, %c0_39], %168 {strides = array<i32>} : memref<2x4xf32, #tpu.memory_space<vmem>>, vector<2x4xf32>,
    return
  }
}

</mosaic_0001>

<llo_original>
// kernel: dqn_forward.1
$region0: #{dqn_forward.1}
  #allocation0 [shape = 'u32[]', space=smem, size = 0x4, offset = 0x4, fixed_abs, tag = 'smem constant byte address 0x4 - core index']
  #allocation1 [shape = 'u32[72,128]{1,0:T(1,128)}', space=vmem, size = 0x9000, scoped, tag = 'internal scratch']
  %s0 = inlined_call_operand.vmem [shape: f32[16,32], index: 0, kind: input, shape index: {}]
  %s1 = inlined_call_operand.vmem [shape: f32[2,32], index: 1, kind: input, shape index: {}]
  %s2 = inlined_call_operand.vmem [shape: f32[2,32], index: 2, kind: input, shape index: {}]
  %s3 = inlined_call_operand.vmem [shape: f32[32,128], index: 3, kind: input, shape index: {}]
  %s4 = inlined_call_operand.vmem [shape: f32[32,128], index: 4, kind: input, shape index: {}]
  %s5 = inlined_call_operand.vmem [shape: f32[1,128], index: 5, kind: input, shape index: {}]
  %s6 = inlined_call_operand.vmem [shape: f32[32,6], index: 6, kind: input, shape index: {}]
  %s7 = inlined_call_operand.vmem [shape: f32[1,6], index: 7, kind: input, shape index: {}]
  %s8 = inlined_call_operand.vmem [shape: f32[2,256], index: 8, kind: output, shape index: {0}]
  %s9 = inlined_call_operand.hbm [shape: f32[2,32], index: 9, kind: output, shape index: {1}]
  %s10 = inlined_call_operand.hbm [shape: f32[2,32], index: 10, kind: output, shape index: {2}]
  %s11 = inlined_call_operand.hbm [shape: f32[2,4], index: 11, kind: output, shape index: {3}]
  %12 = xla_tuple %s8, %s9, %s10, %s11
  %s13 = sld [smem:[#allocation0]]
  $region66: #{dqn_forward.1} parent=0
    _
  %s15 = ssub.s32 1, %s13
  %s16 = scalar_select 0, %s15, %s13
  $region1: #{dqn_forward.1} parent=0
    #allocation2 [shape = 'u8[1024]{0}', space=vmem, size = 0x400, scoped, tag = 'output window, operand 1, single buffered']
    #allocation3 [shape = 's32[1]{0}', space=sflag, size = 0x4, scoped, tag = 'scoped memory for dqn_forward.1']
    #allocation4 [shape = 'u8[1024]{0}', space=vmem, size = 0x400, scoped, tag = 'output window, operand 2, single buffered']
    #allocation5 [shape = 's32[1]{0}', space=sflag, size = 0x4, scoped, tag = 'scoped memory for dqn_forward.1']
    #allocation6 [shape = 'u8[1024]{0}', space=vmem, size = 0x400, scoped, tag = 'output window, operand 3, single buffered']
    %17 = vsyncpa [#allocation3], 0
    %18 = vsyncpa [#allocation5], 0
    // Predicated region
    $region2: #{dqn_forward.1} parent=1 // pred_check
      _
    $region3: #{dqn_forward.1} parent=1 // pred_check_branch
      %20 = sbr.rel (0) target = $region5
    $region4: #{dqn_forward.1} parent=1 // pred_region
      _
    $region5: #{dqn_forward.1} parent=1 // pred_fallthru
      _
    // Predicated region
    $region6: #{dqn_forward.1} parent=1 // pred_check
      _
    $region7: #{dqn_forward.1} parent=1 // pred_check_branch
      %22 = sbr.rel (0) target = $region9
    $region8: #{dqn_forward.1} parent=1 // pred_region
      _
    $region9: #{dqn_forward.1} parent=1 // pred_fallthru
      _
    // Predicated region
    $region10: #{dqn_forward.1} parent=1 // pred_check
      _
    $region11: #{dqn_forward.1} parent=1 // pred_check_branch
      %24 = sbr.rel (0) target = $region13
    $region12: #{dqn_forward.1} parent=1 // pred_region
      _
    $region13: #{dqn_forward.1} parent=1 // pred_fallthru
      _
    // Predicated region
    $region14: #{dqn_forward.1} parent=1 // pred_check
      _
    $region15: #{dqn_forward.1} parent=1 // pred_check_branch
      %26 = sbr.rel (0) target = $region17
    $region16: #{dqn_forward.1} parent=1 // pred_region
      _
    $region17: #{dqn_forward.1} parent=1 // pred_fallthru
      _
    // Predicated region
    $region18: #{dqn_forward.1} parent=1 // pred_check
      _
    $region19: #{dqn_forward.1} parent=1 // pred_check_branch
      %28 = sbr.rel (0) target = $region21
    $region20: #{dqn_forward.1} parent=1 // pred_region
      _
    $region21: #{dqn_forward.1} parent=1 // pred_fallthru
      _
    // Predicated region
    $region22: #{dqn_forward.1} parent=1 // pred_check
      _
    $region23: #{dqn_forward.1} parent=1 // pred_check_branch
      %30 = sbr.rel (0) target = $region25
    $region24: #{dqn_forward.1} parent=1 // pred_region
      _
    $region25: #{dqn_forward.1} parent=1 // pred_fallthru
      _
    // Predicated region
    $region26: #{dqn_forward.1} parent=1 // pred_check
      _
    $region27: #{dqn_forward.1} parent=1 // pred_check_branch
      %32 = sbr.rel (0) target = $region29
    $region28: #{dqn_forward.1} parent=1 // pred_region
      _
    $region29: #{dqn_forward.1} parent=1 // pred_fallthru
      _
    // Predicated region
    $region30: #{dqn_forward.1} parent=1 // pred_check
      _
    $region31: #{dqn_forward.1} parent=1 // pred_check_branch
      %34 = sbr.rel (0) target = $region33
    $region32: #{dqn_forward.1} parent=1 // pred_region
      _
    $region33: #{dqn_forward.1} parent=1 // pred_fallthru
      _
    %v35 = vld [vmem:[%s0] sm:$0xff]
    %v36 = vld [vmem:[%s0 + $0x8] sm:$0xff]
    %v37 = vld [vmem:[%s3] sm:$0xff]
    %v38 = vld [vmem:[%s3 + $0x8] sm:$0xff]
    %v39 = vld [vmem:[%s3 + $0x10] sm:$0xff]
    %v40 = vld [vmem:[%s3 + $0x18] sm:$0xff]
    %v41 = vld [vmem:[%s5] sm:$0x1]
    %v43 = vperm.slane %v41, 0
    %vm45 = vcmask 261120
    %v47 = vsel %vm45, %v35, 0
    %v50 = vsel %vm45, %v36, 0
    %52 = vmatpush.msra.mxu0 0.0
    %53 = vmatpush.msra.mxu0 0.0
    %54 = vmatpush.msra.mxu0 0.0
    %55 = vmatpush.msra.mxu0 0.0
    %56 = vmatpush.msra.mxu0 0.0
    %57 = vmatpush.msra.mxu0 0.0
    %58 = vmatpush.msra.mxu0 0.0
    %59 = vmatpush.msra.mxu0 0.0
    %60 = vmatpush.msra.mxu0 0.0
    %61 = vmatpush.msra.mxu0 0.0
    %62 = vmatpush.msra.mxu0 0.0
    %63 = vmatpush.msra.mxu0 0.0
    %64 = vmatpush.msra.mxu0 %v40
    %65 = vmatpush.msra.mxu0 %v39
    %66 = vmatpush.msra.mxu0 %v38
    %67 = vmatpush.msra.mxu0 %v37
    %68 = vmatmul.f32.gmra.mxu0 %v47
    %v69 = vpop.f32.mrf.mxu0
    %v70 = vadd.f32 %v43, %v69
    %71 = vmatmul.f32.gmra.mxu0 %v50
    %v72 = vpop.f32.mrf.mxu0
    %v73 = vadd.f32 %v43, %v72
    %74 = vdwg.mxu0
    %v75 = vld [vmem:[%s4] sm:$0xff]
    %v76 = vld [vmem:[%s4 + $0x8] sm:$0xff]
    %v77 = vld [vmem:[%s4 + $0x10] sm:$0xff]
    %v78 = vld [vmem:[%s4 + $0x18] sm:$0xff]
    %v79 = vld [vmem:[%s1] sm:$0x3]
    %v80 = vld [vmem:[%s2] sm:$0x3]
    %v82 = vsel %vm45, %v79, 0
    %84 = vmatpush.msra.mxu0 0.0
    %85 = vmatpush.msra.mxu0 0.0
    %86 = vmatpush.msra.mxu0 0.0
    %87 = vmatpush.msra.mxu0 0.0
    %88 = vmatpush.msra.mxu0 0.0
    %89 = vmatpush.msra.mxu0 0.0
    %90 = vmatpush.msra.mxu0 0.0
    %91 = vmatpush.msra.mxu0 0.0
    %92 = vmatpush.msra.mxu0 0.0
    %93 = vmatpush.msra.mxu0 0.0
    %94 = vmatpush.msra.mxu0 0.0
    %95 = vmatpush.msra.mxu0 0.0
    %96 = vmatpush.msra.mxu0 %v78
    %97 = vmatpush.msra.mxu0 %v77
    %98 = vmatpush.msra.mxu0 %v76
    %99 = vmatpush.msra.mxu0 %v75
    %100 = vmatmul.f32.gmra.mxu0 %v82
    %v101 = vpop.f32.mrf.mxu0
    %v102 = vadd.f32 0.0, %v101
    %103 = vdwg.mxu0
    %v104 = vadd.f32 %v70, %v102
    %v105 = vxor.u32 %v104, 2147483648
    %v106 = vmul.f32 %v105, 1.442695
    %v107 = vpow.pop %v106
    %v108 = vadd.f32 %v107, 1.0
    %v109 = vrcp.pop %v108
    %v110 = vmul.f32 %v108, %v109
    %v111 = vsub.f32 1.0, %v110
    %v112 = vmul.f32 %v109, %v111
    %v113 = vadd.f32 %v109, %v112
    %vm114 = vweird.f32 %v108
    %vm115 = vweird.f32 %v109
    %vm116 = vmor %vm114, %vm115
    %v117 = vsel %vm116, %v109, %v113
    %v118 = vand.u32 2147483647, %v108
    %vm119 = vcmp.eq.f32.partialorder %v118, 8.507059e+37
    %v120 = vand.u32 %v108, 2147483648
    %v121 = vor.u32 1.1754944e-38, %v120
    %v122 = vsel %vm119, %v121, %v117
    %v123 = vmul.f32 1.0, %v122
    %v124 = vtanh.pop %v104
    %126 = vrot.lane.b32.xlu0 %v80, 32
    %v127 = vpop.permute.xlu0 %126
    %v129 = vmul.f32 %v123, %v127
    %131 = vrot.lane.b32.xlu0 %v124, 64
    %v132 = vpop.permute.xlu0 %131
    %v134 = vmul.f32 %v123, %v132
    %136 = vrot.lane.b32.xlu0 %v134, 32
    %v137 = vpop.permute.xlu0 %136
    %v139 = vadd.f32 %v129, %v137
    %v140 = vtanh.pop %v139
    %142 = vrot.lane.b32.xlu0 %v140, 64
    %v143 = vpop.permute.xlu0 %142
    %v145 = vmul.f32 %v123, %v143
    %147 = vrot.lane.b32.xlu0 %v145, 32
    %v148 = vpop.permute.xlu0 %147
    %v149 = vsel %vm45, %v148, 0
    %151 = vmatpush.msra.mxu0 0.0
    %152 = vmatpush.msra.mxu0 0.0
    %153 = vmatpush.msra.mxu0 0.0
    %154 = vmatpush.msra.mxu0 0.0
    %155 = vmatpush.msra.mxu0 0.0
    %156 = vmatpush.msra.mxu0 0.0
    %157 = vmatpush.msra.mxu0 0.0
    %158 = vmatpush.msra.mxu0 0.0
    %159 = vmatpush.msra.mxu0 0.0
    %160 = vmatpush.msra.mxu0 0.0
    %161 = vmatpush.msra.mxu0 0.0
    %162 = vmatpush.msra.mxu0 0.0
    %163 = vmatpush.msra.mxu0 %v78
    %164 = vmatpush.msra.mxu0 %v77
    %165 = vmatpush.msra.mxu0 %v76
    %166 = vmatpush.msra.mxu0 %v75
    %167 = vmatmul.f32.gmra.mxu0 %v149
    %v168 = vpop.f32.mrf.mxu0
    %v169 = vadd.f32 0.0, %v168
    %170 = vdwg.mxu0
    %v172 = vrot.slane %v169, 6
    %v174 = vadd.f32 %v70, %v172
    %v175 = vxor.u32 %v174, 2147483648
    %v176 = vmul.f32 %v175, 1.442695
    %v177 = vpow.pop %v176
    %v178 = vadd.f32 %v177, 1.0
    %v179 = vrcp.pop %v178
    %v180 = vmul.f32 %v178, %v179
    %v181 = vsub.f32 1.0, %v180
    %v182 = vmul.f32 %v179, %v181
    %v183 = vadd.f32 %v179, %v182
    %vm184 = vweird.f32 %v178
    %vm185 = vweird.f32 %v179
    %vm186 = vmor %vm184, %vm185
    %v187 = vsel %vm186, %v179, %v183
    %v188 = vand.u32 2147483647, %v178
    %vm189 = vcmp.eq.f32.partialorder %v188, 8.507059e+37
    %v190 = vand.u32 %v178, 2147483648
    %v191 = vor.u32 1.1754944e-38, %v190
    %v192 = vsel %vm189, %v191, %v187
    %v193 = vmul.f32 1.0, %v192
    %v194 = vtanh.pop %v174
    %v196 = vrot.slane %v139, 6
    %v198 = vmul.f32 %v193, %v196
    %200 = vrot.lane.b32.xlu0 %v194, 64
    %v201 = vpop.permute.xlu0 %200
    %v203 = vmul.f32 %v193, %v201
    %205 = vrot.lane.b32.xlu0 %v203, 32
    %v206 = vpop.permute.xlu0 %205
    %v208 = vadd.f32 %v198, %v206
    %v209 = vtanh.pop %v208
    %211 = vrot.lane.b32.xlu0 %v209, 64
    %v212 = vpop.permute.xlu0 %211
    %v214 = vmul.f32 %v193, %v212
    %v216 = vrot.slane %v214, 2
    %217 = vrot.lane.b32.xlu0 %v216, 32
    %v218 = vpop.permute.xlu0 %217
    %v219 = vsel %vm45, %v218, 0
    %221 = vmatpush.msra.mxu0 0.0
    %222 = vmatpush.msra.mxu0 0.0
    %223 = vmatpush.msra.mxu0 0.0
    %224 = vmatpush.msra.mxu0 0.0
    %225 = vmatpush.msra.mxu0 0.0
    %226 = vmatpush.msra.mxu0 0.0
    %227 = vmatpush.msra.mxu0 0.0
    %228 = vmatpush.msra.mxu0 0.0
    %229 = vmatpush.msra.mxu0 0.0
    %230 = vmatpush.msra.mxu0 0.0
    %231 = vmatpush.msra.mxu0 0.0
    %232 = vmatpush.msra.mxu0 0.0
    %233 = vmatpush.msra.mxu0 %v78
    %234 = vmatpush.msra.mxu0 %v77
    %235 = vmatpush.msra.mxu0 %v76
    %236 = vmatpush.msra.mxu0 %v75
    %237 = vmatmul.f32.gmra.mxu0 %v219
    %v238 = vpop.f32.mrf.mxu0
    %v239 = vadd.f32 0.0, %v238
    %240 = vdwg.mxu0
    %v242 = vrot.slane %v239, 4
    %v244 = vadd.f32 %v70, %v242
    %v245 = vxor.u32 %v244, 2147483648
    %v246 = vmul.f32 %v245, 1.442695
    %v247 = vpow.pop %v246
    %v248 = vadd.f32 %v247, 1.0
    %v249 = vrcp.pop %v248
    %v250 = vmul.f32 %v248, %v249
    %v251 = vsub.f32 1.0, %v250
    %v252 = vmul.f32 %v249, %v251
    %v253 = vadd.f32 %v249, %v252
    %vm254 = vweird.f32 %v248
    %vm255 = vweird.f32 %v249
    %vm256 = vmor %vm254, %vm255
    %v257 = vsel %vm256, %v249, %v253
    %v258 = vand.u32 2147483647, %v248
    %vm259 = vcmp.eq.f32.partialorder %v258, 8.507059e+37
    %v260 = vand.u32 %v248, 2147483648
    %v261 = vor.u32 1.1754944e-38, %v260
    %v262 = vsel %vm259, %v261, %v257
    %v263 = vmul.f32 1.0, %v262
    %v264 = vtanh.pop %v244
    %v266 = vrot.slane %v208, 6
    %v268 = vmul.f32 %v263, %v266
    %270 = vrot.lane.b32.xlu0 %v264, 64
    %v271 = vpop.permute.xlu0 %270
    %v273 = vmul.f32 %v263, %v271
    %275 = vrot.lane.b32.xlu0 %v273, 32
    %v276 = vpop.permute.xlu0 %275
    %v278 = vadd.f32 %v268, %v276
    %v279 = vtanh.pop %v278
    %281 = vrot.lane.b32.xlu0 %v279, 64
    %v282 = vpop.permute.xlu0 %281
    %v284 = vmul.f32 %v263, %v282
    %v286 = vrot.slane %v284, 4
    %287 = vrot.lane.b32.xlu0 %v286, 32
    %v288 = vpop.permute.xlu0 %287
    %v289 = vsel %vm45, %v288, 0
    %291 = vmatpush.msra.mxu0 0.0
    %292 = vmatpush.msra.mxu0 0.0
    %293 = vmatpush.msra.mxu0 0.0
    %294 = vmatpush.msra.mxu0 0.0
    %295 = vmatpush.msra.mxu0 0.0
    %296 = vmatpush.msra.mxu0 0.0
    %297 = vmatpush.msra.mxu0 0.0
    %298 = vmatpush.msra.mxu0 0.0
    %299 = vmatpush.msra.mxu0 0.0
    %300 = vmatpush.msra.mxu0 0.0
    %301 = vmatpush.msra.mxu0 0.0
    %302 = vmatpush.msra.mxu0 0.0
    %303 = vmatpush.msra.mxu0 %v78
    %304 = vmatpush.msra.mxu0 %v77
    %305 = vmatpush.msra.mxu0 %v76
    %306 = vmatpush.msra.mxu0 %v75
    %307 = vmatmul.f32.gmra.mxu0 %v289
    %v308 = vpop.f32.mrf.mxu0
    %v309 = vadd.f32 0.0, %v308
    %310 = vdwg.mxu0
    %v312 = vrot.slane %v309, 2
    %v314 = vadd.f32 %v70, %v312
    %v315 = vxor.u32 %v314, 2147483648
    %v316 = vmul.f32 %v315, 1.442695
    %v317 = vpow.pop %v316
    %v318 = vadd.f32 %v317, 1.0
    %v319 = vrcp.pop %v318
    %v320 = vmul.f32 %v318, %v319
    %v321 = vsub.f32 1.0, %v320
    %v322 = vmul.f32 %v319, %v321
    %v323 = vadd.f32 %v319, %v322
    %vm324 = vweird.f32 %v318
    %vm325 = vweird.f32 %v319
    %vm326 = vmor %vm324, %vm325
    %v327 = vsel %vm326, %v319, %v323
    %v328 = vand.u32 2147483647, %v318
    %vm329 = vcmp.eq.f32.partialorder %v328, 8.507059e+37
    %v330 = vand.u32 %v318, 2147483648
    %v331 = vor.u32 1.1754944e-38, %v330
    %v332 = vsel %vm329, %v331, %v327
    %v333 = vmul.f32 1.0, %v332
    %v334 = vtanh.pop %v314
    %v336 = vrot.slane %v278, 6
    %v338 = vmul.f32 %v333, %v336
    %340 = vrot.lane.b32.xlu0 %v334, 64
    %v341 = vpop.permute.xlu0 %340
    %v343 = vmul.f32 %v333, %v341
    %345 = vrot.lane.b32.xlu0 %v343, 32
    %v346 = vpop.permute.xlu0 %345
    %v348 = vadd.f32 %v338, %v346
    %v349 = vtanh.pop %v348
    %351 = vrot.lane.b32.xlu0 %v349, 64
    %v352 = vpop.permute.xlu0 %351
    %v354 = vmul.f32 %v333, %v352
    %v356 = vrot.slane %v354, 6
    %357 = vrot.lane.b32.xlu0 %v356, 32
    %v358 = vpop.permute.xlu0 %357
    %v359 = vsel %vm45, %v358, 0
    %361 = vmatpush.msra.mxu0 0.0
    %362 = vmatpush.msra.mxu0 0.0
    %363 = vmatpush.msra.mxu0 0.0
    %364 = vmatpush.msra.mxu0 0.0
    %365 = vmatpush.msra.mxu0 0.0
    %366 = vmatpush.msra.mxu0 0.0
    %367 = vmatpush.msra.mxu0 0.0
    %368 = vmatpush.msra.mxu0 0.0
    %369 = vmatpush.msra.mxu0 0.0
    %370 = vmatpush.msra.mxu0 0.0
    %371 = vmatpush.msra.mxu0 0.0
    %372 = vmatpush.msra.mxu0 0.0
    %373 = vmatpush.msra.mxu0 %v78
    %374 = vmatpush.msra.mxu0 %v77
    %375 = vmatpush.msra.mxu0 %v76
    %376 = vmatpush.msra.mxu0 %v75
    %377 = vmatmul.f32.gmra.mxu0 %v359
    %v378 = vpop.f32.mrf.mxu0
    %v379 = vadd.f32 0.0, %v378
    %380 = vdwg.mxu0
    %v381 = vadd.f32 %v73, %v379
    %v382 = vxor.u32 %v381, 2147483648
    %v383 = vmul.f32 %v382, 1.442695
    %v384 = vpow.pop %v383
    %v385 = vadd.f32 %v384, 1.0
    %v386 = vrcp.pop %v385
    %v387 = vmul.f32 %v385, %v386
    %v388 = vsub.f32 1.0, %v387
    %v389 = vmul.f32 %v386, %v388
    %v390 = vadd.f32 %v386, %v389
    %vm391 = vweird.f32 %v385
    %vm392 = vweird.f32 %v386
    %vm393 = vmor %vm391, %vm392
    %v394 = vsel %vm393, %v386, %v390
    %v395 = vand.u32 2147483647, %v385
    %vm396 = vcmp.eq.f32.partialorder %v395, 8.507059e+37
    %v397 = vand.u32 %v385, 2147483648
    %v398 = vor.u32 1.1754944e-38, %v397
    %v399 = vsel %vm396, %v398, %v394
    %v400 = vmul.f32 1.0, %v399
    %v401 = vtanh.pop %v381
    %v403 = vrot.slane %v348, 6
    %v405 = vmul.f32 %v400, %v403
    %407 = vrot.lane.b32.xlu0 %v401, 64
    %v408 = vpop.permute.xlu0 %407
    %v410 = vmul.f32 %v400, %v408
    %412 = vrot.lane.b32.xlu0 %v410, 32
    %v413 = vpop.permute.xlu0 %412
    %v415 = vadd.f32 %v405, %v413
    %v416 = vtanh.pop %v415
    %418 = vrot.lane.b32.xlu0 %v416, 64
    %v419 = vpop.permute.xlu0 %418
    %v421 = vmul.f32 %v400, %v419
    %423 = vrot.lane.b32.xlu0 %v421, 32
    %v424 = vpop.permute.xlu0 %423
    %v425 = vsel %vm45, %v424, 0
    %427 = vmatpush.msra.mxu0 0.0
    %428 = vmatpush.msra.mxu0 0.0
    %429 = vmatpush.msra.mxu0 0.0
    %430 = vmatpush.msra.mxu0 0.0
    %431 = vmatpush.msra.mxu0 0.0
    %432 = vmatpush.msra.mxu0 0.0
    %433 = vmatpush.msra.mxu0 0.0
    %434 = vmatpush.msra.mxu0 0.0
    %435 = vmatpush.msra.mxu0 0.0
    %436 = vmatpush.msra.mxu0 0.0
    %437 = vmatpush.msra.mxu0 0.0
    %438 = vmatpush.msra.mxu0 0.0
    %439 = vmatpush.msra.mxu0 %v78
    %440 = vmatpush.msra.mxu0 %v77
    %441 = vmatpush.msra.mxu0 %v76
    %442 = vmatpush.msra.mxu0 %v75
    %443 = vmatmul.f32.gmra.mxu0 %v425
    %v444 = vpop.f32.mrf.mxu0
    %v445 = vadd.f32 0.0, %v444
    %446 = vdwg.mxu0
    %v448 = vrot.slane %v445, 6
    %v450 = vadd.f32 %v73, %v448
    %v451 = vxor.u32 %v450, 2147483648
    %v452 = vmul.f32 %v451, 1.442695
    %v453 = vpow.pop %v452
    %v454 = vadd.f32 %v453, 1.0
    %v455 = vrcp.pop %v454
    %v456 = vmul.f32 %v454, %v455
    %v457 = vsub.f32 1.0, %v456
    %v458 = vmul.f32 %v455, %v457
    %v459 = vadd.f32 %v455, %v458
    %vm460 = vweird.f32 %v454
    %vm461 = vweird.f32 %v455
    %vm462 = vmor %vm460, %vm461
    %v463 = vsel %vm462, %v455, %v459
    %v464 = vand.u32 2147483647, %v454
    %vm465 = vcmp.eq.f32.partialorder %v464, 8.507059e+37
    %v466 = vand.u32 %v454, 2147483648
    %v467 = vor.u32 1.1754944e-38, %v466
    %v468 = vsel %vm465, %v467, %v463
    %v469 = vmul.f32 1.0, %v468
    %v470 = vtanh.pop %v450
    %v472 = vrot.slane %v415, 6
    %v474 = vmul.f32 %v469, %v472
    %476 = vrot.lane.b32.xlu0 %v470, 64
    %v477 = vpop.permute.xlu0 %476
    %v479 = vmul.f32 %v469, %v477
    %481 = vrot.lane.b32.xlu0 %v479, 32
    %v482 = vpop.permute.xlu0 %481
    %v484 = vadd.f32 %v474, %v482
    %v485 = vtanh.pop %v484
    %487 = vrot.lane.b32.xlu0 %v485, 64
    %v488 = vpop.permute.xlu0 %487
    %v490 = vmul.f32 %v469, %v488
    %v492 = vrot.slane %v490, 2
    %493 = vrot.lane.b32.xlu0 %v492, 32
    %v494 = vpop.permute.xlu0 %493
    %v495 = vsel %vm45, %v494, 0
    %497 = vmatpush.msra.mxu0 0.0
    %498 = vmatpush.msra.mxu0 0.0
    %499 = vmatpush.msra.mxu0 0.0
    %500 = vmatpush.msra.mxu0 0.0
    %501 = vmatpush.msra.mxu0 0.0
    %502 = vmatpush.msra.mxu0 0.0
    %503 = vmatpush.msra.mxu0 0.0
    %504 = vmatpush.msra.mxu0 0.0
    %505 = vmatpush.msra.mxu0 0.0
    %506 = vmatpush.msra.mxu0 0.0
    %507 = vmatpush.msra.mxu0 0.0
    %508 = vmatpush.msra.mxu0 0.0
    %509 = vmatpush.msra.mxu0 %v78
    %510 = vmatpush.msra.mxu0 %v77
    %511 = vmatpush.msra.mxu0 %v76
    %512 = vmatpush.msra.mxu0 %v75
    %513 = vmatmul.f32.gmra.mxu0 %v495
    %v514 = vpop.f32.mrf.mxu0
    %v515 = vadd.f32 0.0, %v514
    %516 = vdwg.mxu0
    %v518 = vrot.slane %v515, 4
    %v520 = vadd.f32 %v73, %v518
    %v521 = vxor.u32 %v520, 2147483648
    %v522 = vmul.f32 %v521, 1.442695
    %v523 = vpow.pop %v522
    %v524 = vadd.f32 %v523, 1.0
    %v525 = vrcp.pop %v524
    %v526 = vmul.f32 %v524, %v525
    %v527 = vsub.f32 1.0, %v526
    %v528 = vmul.f32 %v525, %v527
    %v529 = vadd.f32 %v525, %v528
    %vm530 = vweird.f32 %v524
    %vm531 = vweird.f32 %v525
    %vm532 = vmor %vm530, %vm531
    %v533 = vsel %vm532, %v525, %v529
    %v534 = vand.u32 2147483647, %v524
    %vm535 = vcmp.eq.f32.partialorder %v534, 8.507059e+37
    %v536 = vand.u32 %v524, 2147483648
    %v537 = vor.u32 1.1754944e-38, %v536
    %v538 = vsel %vm535, %v537, %v533
    %v539 = vmul.f32 1.0, %v538
    %v540 = vtanh.pop %v520
    %v542 = vrot.slane %v484, 6
    %v544 = vmul.f32 %v539, %v542
    %546 = vrot.lane.b32.xlu0 %v540, 64
    %v547 = vpop.permute.xlu0 %546
    %v549 = vmul.f32 %v539, %v547
    %551 = vrot.lane.b32.xlu0 %v549, 32
    %v552 = vpop.permute.xlu0 %551
    %v554 = vadd.f32 %v544, %v552
    %v555 = vtanh.pop %v554
    %557 = vrot.lane.b32.xlu0 %v555, 64
    %v558 = vpop.permute.xlu0 %557
    %v560 = vmul.f32 %v539, %v558
    %v562 = vrot.slane %v560, 4
    %563 = vrot.lane.b32.xlu0 %v562, 32
    %v564 = vpop.permute.xlu0 %563
    %v565 = vsel %vm45, %v564, 0
    %567 = vmatpush.msra.mxu0 0.0
    %568 = vmatpush.msra.mxu0 0.0
    %569 = vmatpush.msra.mxu0 0.0
    %570 = vmatpush.msra.mxu0 0.0
    %571 = vmatpush.msra.mxu0 0.0
    %572 = vmatpush.msra.mxu0 0.0
    %573 = vmatpush.msra.mxu0 0.0
    %574 = vmatpush.msra.mxu0 0.0
    %575 = vmatpush.msra.mxu0 0.0
    %576 = vmatpush.msra.mxu0 0.0
    %577 = vmatpush.msra.mxu0 0.0
    %578 = vmatpush.msra.mxu0 0.0
    %579 = vmatpush.msra.mxu0 %v78
    %580 = vmatpush.msra.mxu0 %v77
    %581 = vmatpush.msra.mxu0 %v76
    %582 = vmatpush.msra.mxu0 %v75
    %583 = vmatmul.f32.gmra.mxu0 %v565
    %v584 = vpop.f32.mrf.mxu0
    %v585 = vadd.f32 0.0, %v584
    %586 = vdwg.mxu0
    %v588 = vrot.slane %v585, 2
    %v590 = vadd.f32 %v73, %v588
    %v591 = vxor.u32 %v590, 2147483648
    %v592 = vmul.f32 %v591, 1.442695
    %v593 = vpow.pop %v592
    %v594 = vadd.f32 %v593, 1.0
    %v595 = vrcp.pop %v594
    %v596 = vmul.f32 %v594, %v595
    %v597 = vsub.f32 1.0, %v596
    %v598 = vmul.f32 %v595, %v597
    %v599 = vadd.f32 %v595, %v598
    %vm600 = vweird.f32 %v594
    %vm601 = vweird.f32 %v595
    %vm602 = vmor %vm600, %vm601
    %v603 = vsel %vm602, %v595, %v599
    %v604 = vand.u32 2147483647, %v594
    %vm605 = vcmp.eq.f32.partialorder %v604, 8.507059e+37
    %v606 = vand.u32 %v594, 2147483648
    %v607 = vor.u32 1.1754944e-38, %v606
    %v608 = vsel %vm605, %v607, %v603
    %v609 = vmul.f32 1.0, %v608
    %v610 = vtanh.pop %v590
    %v612 = vrot.slane %v554, 6
    %v614 = vmul.f32 %v609, %v612
    %616 = vrot.lane.b32.xlu0 %v610, 64
    %v617 = vpop.permute.xlu0 %616
    %v619 = vmul.f32 %v609, %v617
    %621 = vrot.lane.b32.xlu0 %v619, 32
    %v622 = vpop.permute.xlu0 %621
    %v624 = vadd.f32 %v614, %v622
    %v625 = vtanh.pop %v624
    %627 = vrot.lane.b32.xlu0 %v625, 64
    %v628 = vpop.permute.xlu0 %627
    %v630 = vmul.f32 %v609, %v628
    %632 = vrot.lane.b32.xlu0 %v216, 64
    %v633 = vpop.permute.xlu0 %632
    %635 = vrot.lane.b32.xlu0 %v286, 96
    %v636 = vpop.permute.xlu0 %635
    %640 = vrot.lane.b32.xlu0 %v492, 64
    %v641 = vpop.permute.xlu0 %640
    %643 = vrot.lane.b32.xlu0 %v562, 96
    %v644 = vpop.permute.xlu0 %643
    %v647 = vrot.slane %v630, 6
    %v649 = vsel %vm45, %v148, %v633
    %vm650 = vcmask 523264
    %v651 = vsel %vm650, %v649, %v636
    %vm652 = vcmask 785408
    %v653 = vsel %vm652, %v651, %v356
    %v654 = vsel %vm45, %v424, %v641
    %v655 = vsel %vm650, %v654, %v644
    %v656 = vsel %vm652, %v655, %v647
    %v659 = vrot.slane %v656, 6
    %vm660 = vcmask 1041408
    %v661 = vsel %vm660, %v653, %v659
    %663 = vst [vmem:[%s8] sm:$0xf] %v661
    %664 = vrot.lane.b32.xlu0 %v630, 32
    %v665 = vpop.permute.xlu0 %664
    %vm667 = vcmask 261126
    %668 = vst.msk [vmem:[#allocation2 - $0x6] sm:$0xc0] %vm667, %v665
    %670 = vrot.lane.b32.xlu0 %v624, 96
    %v671 = vpop.permute.xlu0 %670
    %673 = vst.msk [vmem:[#allocation4 - $0x6] sm:$0xc0] %vm667, %v671
    %v674 = vld [vmem:[%s6] sm:$0xff]
    %v675 = vld [vmem:[%s6 + $0x8] sm:$0xff]
    %v676 = vld [vmem:[%s6 + $0x10] sm:$0xff]
    %v677 = vld [vmem:[%s6 + $0x18] sm:$0xff]
    %v678 = vld [vmem:[%s7] sm:$0x1]
    %v680 = vperm.slane %v678, 0
    %682 = vrot.lane.b32.xlu0 %v647, 32
    %v683 = vpop.permute.xlu0 %682
    %v684 = vsel %vm45, %v683, 0
    %686 = vmatpush.msra.mxu0 0.0
    %687 = vmatpush.msra.mxu0 0.0
    %688 = vmatpush.msra.mxu0 0.0
    %689 = vmatpush.msra.mxu0 0.0
    %690 = vmatpush.msra.mxu0 0.0
    %691 = vmatpush.msra.mxu0 0.0
    %692 = vmatpush.msra.mxu0 0.0
    %693 = vmatpush.msra.mxu0 0.0
    %694 = vmatpush.msra.mxu0 0.0
    %695 = vmatpush.msra.mxu0 0.0
    %696 = vmatpush.msra.mxu0 0.0
    %697 = vmatpush.msra.mxu0 0.0
    %698 = vmatpush.msra.mxu0 %v677
    %699 = vmatpush.msra.mxu0 %v676
    %700 = vmatpush.msra.mxu0 %v675
    %701 = vmatpush.msra.mxu0 %v674
    %702 = vmatmul.f32.gmra.mxu0 %v684
    %v703 = vpop.f32.mrf.mxu0
    %v704 = vadd.f32 %v680, %v703
    %705 = vdwg.mxu0
    %707 = vset.pattern.permute.xlu0 4
    %708 = vperm.xlu0 %707, %v704
    %v709 = vpop.permute.xlu0 %708
    %v711 = vadd.f32 %v709, %v704
    %712 = vset.pattern.permute.xlu0 5
    %713 = vperm.xlu0 %712, %v704
    %v714 = vpop.permute.xlu0 %713
    %v716 = vsub.f32 %v711, %v714
    %vm717 = vcmask 25600
    %718 = vst.msk [vmem:[#allocation6] sm:$0x3] %vm717, %v716
    // Predicated region
    $region34: #{dqn_forward.1} parent=1 // pred_check
      _
    $region35: #{dqn_forward.1} parent=1 // pred_check_branch
      %720 = sbr.rel (0) target = $region37
    $region36: #{dqn_forward.1} parent=1 // pred_region
      _
    $region37: #{dqn_forward.1} parent=1 // pred_fallthru
      _
    // Predicated region
    $region38: #{dqn_forward.1} parent=1 // pred_check
      _
    $region39: #{dqn_forward.1} parent=1 // pred_check_branch
      %722 = sbr.rel (0) target = $region41
    $region40: #{dqn_forward.1} parent=1 // pred_region
      %724 = vsyncadd [#allocation3], 0
      %s726 = sshll.u32 [#allocation2], 4
      %s727 = int_to_ptr.vmem [resolvable:$true] %s726
      %s728 = sshll.u32 %s9, 4
      %s729 = int_to_ptr.hbm [resolvable:$true] %s728
      %731 = dma.vmem_to_hbm [thread:$0]  %s727, 32, %s729, [#allocation3]
    $region41: #{dqn_forward.1} parent=1 // pred_fallthru
      _
    // Predicated region
    $region42: #{dqn_forward.1} parent=1 // pred_check
      _
    $region43: #{dqn_forward.1} parent=1 // pred_check_branch
      %733 = sbr.rel (0) target = $region45
    $region44: #{dqn_forward.1} parent=1 // pred_region
      %735 = vsyncadd [#allocation5], 0
      %s737 = sshll.u32 [#allocation4], 4
      %s738 = int_to_ptr.vmem [resolvable:$true] %s737
      %s739 = sshll.u32 %s10, 4
      %s740 = int_to_ptr.hbm [resolvable:$true] %s739
      %742 = dma.vmem_to_hbm [thread:$0]  %s738, 32, %s740, [#allocation5]
    $region45: #{dqn_forward.1} parent=1 // pred_fallthru
      _
    // Predicated region
    $region46: #{dqn_forward.1} parent=1 // pred_check
      _
    $region47: #{dqn_forward.1} parent=1 // pred_check_branch
      %744 = sbr.rel (0) target = $region49
    $region48: #{dqn_forward.1} parent=1 // pred_region
      %746 = vsyncadd [#allocation5], 0
      %s748 = sshll.u32 [#allocation6], 4
      %s749 = int_to_ptr.vmem [resolvable:$true] %s748
      %s750 = sshll.u32 %s11, 4
      %s751 = int_to_ptr.hbm [resolvable:$true] %s750
      %753 = dma.vmem_to_hbm [thread:$0]  %s749, 32, %s751, [#allocation5]
    $region49: #{dqn_forward.1} parent=1 // pred_fallthru
      _
    // Predicated region
    $region50: #{dqn_forward.1} parent=1 // pred_check
      _
    $region51: #{dqn_forward.1} parent=1 // pred_check_branch
      %755 = sbr.rel (0) target = $region53
    $region52: #{dqn_forward.1} parent=1 // pred_region
      _
    $region53: #{dqn_forward.1} parent=1 // pred_fallthru
      _
    // Predicated region
    $region54: #{dqn_forward.1} parent=1 // pred_check
      _
    $region55: #{dqn_forward.1} parent=1 // pred_check_branch
      %757 = sbr.rel (0) target = $region57
    $region56: #{dqn_forward.1} parent=1 // pred_region
      %759 = dma.done [#allocation3], 32
    $region57: #{dqn_forward.1} parent=1 // pred_fallthru
      _
    // Predicated region
    $region58: #{dqn_forward.1} parent=1 // pred_check
      _
    $region59: #{dqn_forward.1} parent=1 // pred_check_branch
      %761 = sbr.rel (0) target = $region61
    $region60: #{dqn_forward.1} parent=1 // pred_region
      %763 = dma.done [#allocation5], 32
    $region61: #{dqn_forward.1} parent=1 // pred_fallthru
      _
    // Predicated region
    $region62: #{dqn_forward.1} parent=1 // pred_check
      _
    $region63: #{dqn_forward.1} parent=1 // pred_check_branch
      %765 = sbr.rel (0) target = $region65
    $region64: #{dqn_forward.1} parent=1 // pred_region
      %767 = dma.done [#allocation5], 32
    $region65: #{dqn_forward.1} parent=1 // pred_fallthru
      _
    %768 = vsyncpa [#allocation3], 1
    %769 = vsyncpa [#allocation5], 1

</llo_original>
